<compile_context>
chip_gen: v7x
topology: tpu7x:2x2x1
jax: 0.10.0
libtpu: 0.0.40
codegen_flags: <defaults>
</compile_context>

<pallas_src>
import functools

import jax
import jax.numpy as jnp
from jax.experimental import pallas as pl
from jax.experimental.pallas import tpu as pltpu


def _lsce_kernel(x_ref, xt_ref, out_ref, *, confidence, smoothing, n_valid, tm):
    i = pl.program_id(0)

    x = x_ref[...]                                          # (tm, C) native dtype
    c = x.shape[-1]

    # Numerically stable logsumexp pieces; single (tm, C) upcast for the exp path.
    m = jnp.max(x, axis=-1, keepdims=True)                  # (tm, 1) native dtype
    xm = (x - m).astype(jnp.float32)                        # (tm, C) f32
    se = jnp.sum(jnp.exp(xm), axis=-1, keepdims=True)       # (tm, 1) f32
    lse = jnp.log(se)                                       # (tm, 1) f32
    m32 = m.astype(jnp.float32)

    # sum(x) per row recovered from the shifted values: sum(x - m) + C * m.
    row_sum = jnp.sum(xm, axis=-1, keepdims=True) + c * m32  # (tm, 1) f32

    # Gathered target logit comes from the wrapper (no in-kernel one-hot).
    x_tgt = xt_ref[...]                                      # (tm, 1) f32
    weighted = confidence * x_tgt + (smoothing / c) * row_sum

    # conf*nll + smooth*smooth_loss == (m + lse) - weighted   (conf + smooth == 1)
    loss = (m32 + lse) - weighted                             # (tm, 1) f32

    # Mask rows beyond the valid batch (ragged last block contains garbage rows).
    row = jax.lax.broadcasted_iota(jnp.int32, (tm, 1), 0) + i * tm
    loss = jnp.where(row < n_valid, loss, 0.0)

    s = jnp.sum(loss)                                         # block partial sum
    # Broadcast the scalar into this block's private output tile (no iota/select
    # epilogue); the wrapper reads one element per tile.
    out_ref[...] = jnp.full((8, 128), s, dtype=jnp.float32)


def _round_up(v, m):
    return ((v + m - 1) // m) * m


def _vmem_capacity_bytes():
    try:
        info = pltpu.get_tpu_info()
        cap = getattr(info, "vmem_capacity_bytes", None)
        if cap:
            return int(cap)
    except Exception:
        pass
    return 64 * 2**20  # conservative fallback (v7x-sized)


def label_smoothing_cross_entropy(x, target, *, smoothing=0.3, tm=None):
    """x: (N, C) float, target: (N,) int -> scalar float32 loss (mean over batch)."""
    assert smoothing < 1.0
    confidence = 1.0 - smoothing
    n, c = x.shape
    itemsize = jnp.dtype(x.dtype).itemsize

    # Generation-aware VMEM budget / scoped limit.
    capacity = _vmem_capacity_bytes()
    if capacity >= 96 * 2**20:            # v5e / v6e: 128 MiB physical VMEM
        budget, vmem_limit = 72 * 2**20, 96 * 2**20
    else:                                  # v7x: 64 MiB per TensorCore
        budget, vmem_limit = 28 * 2**20, 40 * 2**20

    # Per-row VMEM estimate: double-buffered input block + live f32 temporaries
    # (upcast x - m, exp result) + gathered-target column + slack.
    per_row = c * (2 * itemsize + 12) + 64

    if tm is None:
        tm_budget = max(8, (budget // per_row) // 8 * 8)
        # Target ~8 MiB input blocks so the ~0.35 us per-grid-step cost amortizes.
        tm_bytes = max(8, _round_up(pl.cdiv(8 * 2**20, c * itemsize), 8))
        tm = min(tm_budget, tm_bytes)
    tm = max(8, (int(tm) // 8) * 8)
    tm = min(tm, _round_up(n, 8))          # no point tiling past the batch
    if n > 8:
        # Guarantee >= 2 grid blocks so both v7x TensorCores get work
        # (harmless extra grid step on single-TC v5e/v6e).
        tm = min(tm, max(8, ((n - 1) // 8) * 8))

    num_blocks = pl.cdiv(n, tm)

    # Gather the target logit per row in the wrapper (reads only N elements of x);
    # removes the (tm, C) iota/compare/select/multiply from the kernel's VALU path.
    x_tgt = jnp.take_along_axis(
        x, target.reshape(n, 1).astype(jnp.int32), axis=1
    ).astype(jnp.float32)

    kernel = functools.partial(
        _lsce_kernel,
        confidence=float(confidence),
        smoothing=float(smoothing),
        n_valid=int(n),
        tm=int(tm),
    )

    partials = pl.pallas_call(
        kernel,
        out_shape=jax.ShapeDtypeStruct((num_blocks * 8, 128), jnp.float32),
        grid_spec=pltpu.PrefetchScalarGridSpec(
            num_scalar_prefetch=0,
            grid=(num_blocks,),
            in_specs=[
                pl.BlockSpec((tm, c), lambda i: (i, 0)),
                pl.BlockSpec((tm, 1), lambda i: (i, 0)),
            ],
            out_specs=pl.BlockSpec((8, 128), lambda i: (i, 0)),
        ),
        compiler_params=pltpu.CompilerParams(
            dimension_semantics=("parallel",),
            vmem_limit_bytes=int(vmem_limit),
        ),
    )(x, x_tgt)

    # Each block's tile is filled with its scalar partial sum; take one per tile.
    return jnp.sum(partials[::8, 0], dtype=jnp.float32) / jnp.float32(n)


def _reference(x, target, smoothing=0.3):
    confidence = 1.0 - smoothing
    logprobs = jax.nn.log_softmax(x.astype(jnp.float32), axis=-1)
    nll = -jnp.take_along_axis(logprobs, target[:, None], axis=-1)[:, 0]
    smooth = -jnp.mean(logprobs, axis=-1)
    return jnp.mean(confidence * nll + smoothing * smooth)


if __name__ == "__main__":
    key = jax.random.PRNGKey(0)
    kx, kt = jax.random.split(key)

    # Small shapes consistent with the module: batch of logits over C classes.
    N, C = 8, 32
    x = jax.random.normal(kx, (N, C), dtype=jnp.float32)
    target = jax.random.randint(kt, (N,), 0, C, dtype=jnp.int32)

    loss = label_smoothing_cross_entropy(x, target, smoothing=0.3)
    loss = jax.block_until_ready(loss)
    ref = _reference(x, target, smoothing=0.3)
    assert jnp.allclose(loss, ref, atol=1e-5, rtol=1e-5), (loss, ref)

    # Multi-block + ragged path: batch not a multiple of the row tile, >= 2 blocks.
    N2 = 20
    kx2, kt2 = jax.random.split(jax.random.PRNGKey(1))
    x2 = jax.random.normal(kx2, (N2, C), dtype=jnp.float32)
    t2 = jax.random.randint(kt2, (N2,), 0, C, dtype=jnp.int32)
    loss2 = jax.block_until_ready(label_smoothing_cross_entropy(x2, t2, smoothing=0.3))
    ref2 = _reference(x2, t2, smoothing=0.3)
    assert jnp.allclose(loss2, ref2, atol=1e-5, rtol=1e-5), (loss2, ref2)

    print("KERNEL_OK")
</pallas_src>

<mosaic_0001>
module attributes {stable_mosaic.version = 11 : i64} {
  func.func @_lsce_kernel(%arg0: i32, %arg1: memref<8x32xf32, #tpu.memory_space<vmem>>, %arg2: memref<8x1xf32, #tpu.memory_space<vmem>>, %arg3: memref<8x128xf32, #tpu.memory_space<vmem>>) attributes {dimension_semantics = [#tpu.dimension_semantics<parallel>], iteration_bounds = array<i64: 1>, scalar_prefetch = 0 : i64, scratch_operands = 0 : i64, tpu.core_type = #tpu.core_type<tc>, window_params = [{transform_indices = @transform_0, window_bounds = array<i64: 8, 32>}, {transform_indices = @transform_1, window_bounds = array<i64: 8, 1>}, {transform_indices = @transform_2, window_bounds = array<i64: 8, 128>}]} {
    %c0 = arith.constant 0 : index
    %c0_0 = arith.constant 0 : index
    %0 = vector.load %arg1[%c0, %c0_0] : memref<8x32xf32, #tpu.memory_space<vmem>>, vector<8x32xf32>
    %cst = arith.constant dense<0xFF800000> : vector<8xf32>
    %1 = vector.multi_reduction <maximumf>, %0, %cst [1] : vector<8x32xf32> to vector<8xf32>
    %2 = vector.shape_cast %1 : vector<8xf32> to vector<8x1xf32>
    %3 = vector.broadcast %2 : vector<8x1xf32> to vector<8x32xf32>
    %4 = arith.subf %0, %3 : vector<8x32xf32>
    %5 = math.exp %4 : vector<8x32xf32>
    %cst_1 = arith.constant dense<0.000000e+00> : vector<8xf32>
    %6 = vector.multi_reduction <add>, %5, %cst_1 [1] : vector<8x32xf32> to vector<8xf32>
    %7 = vector.shape_cast %6 : vector<8xf32> to vector<8x1xf32>
    %8 = math.log %7 : vector<8x1xf32>
    %cst_2 = arith.constant dense<0.000000e+00> : vector<8xf32>
    %9 = vector.multi_reduction <add>, %4, %cst_2 [1] : vector<8x32xf32> to vector<8xf32>
    %10 = vector.shape_cast %9 : vector<8xf32> to vector<8x1xf32>
    %cst_3 = arith.constant 3.200000e+01 : f32
    %11 = vector.broadcast %cst_3 : f32 to vector<8x1xf32>
    %12 = arith.mulf %11, %2 : vector<8x1xf32>
    %13 = arith.addf %10, %12 : vector<8x1xf32>
    %c0_4 = arith.constant 0 : index
    %c0_5 = arith.constant 0 : index
    %14 = vector.load %arg2[%c0_4, %c0_5] : memref<8x1xf32, #tpu.memory_space<vmem>>, vector<8x1xf32>
    %cst_6 = arith.constant 0.699999988 : f32
    %15 = vector.broadcast %cst_6 : f32 to vector<8x1xf32>
    %16 = arith.mulf %15, %14 : vector<8x1xf32>
    %cst_7 = arith.constant 9.375000e-03 : f32
    %17 = vector.broadcast %cst_7 : f32 to vector<8x1xf32>
    %18 = arith.mulf %17, %13 : vector<8x1xf32>
    %19 = arith.addf %16, %18 : vector<8x1xf32>
    %20 = arith.addf %2, %8 : vector<8x1xf32>
    %21 = arith.subf %20, %19 : vector<8x1xf32>
    %22 = tpu.iota {dimensions = array<i32: 0>} : vector<8x1xi32>
    %c8_i32 = arith.constant 8 : i32
    %23 = arith.muli %arg0, %c8_i32 : i32
    %24 = vector.broadcast %23 : i32 to vector<8x1xi32>
    %25 = arith.addi %22, %24 : vector<8x1xi32>
    %c8_i32_8 = arith.constant 8 : i32
    %26 = vector.broadcast %c8_i32_8 : i32 to vector<8x1xi32>
    %27 = arith.cmpi slt, %25, %26 : vector<8x1xi32>
    %cst_9 = arith.constant 0.000000e+00 : f32
    %28 = vector.broadcast %cst_9 : f32 to vector<8x1xf32>
    %29 = arith.select %27, %21, %28 : vector<8x1xi1>, vector<8x1xf32>
    %30 = vector.shape_cast %29 : vector<8x1xf32> to vector<1x8x1xf32>
    %cst_10 = arith.constant dense<0.000000e+00> : vector<1xf32>
    %31 = vector.multi_reduction <add>, %30, %cst_10 [1, 2] : vector<1x8x1xf32> to vector<1xf32>
    %32 = vector.shape_cast %31 : vector<1xf32> to vector<1x1x1xf32>
    %33 = vector.extract %32[0, 0, 0] : f32 from vector<1x1x1xf32>
    %34 = vector.broadcast %33 : f32 to vector<8x128xf32>
    %c0_11 = arith.constant 0 : index
    %c0_12 = arith.constant 0 : index
    %35 = vector.load %arg3[%c0_11, %c0_12] : memref<8x128xf32, #tpu.memory_space<vmem>>, vector<8x128xf32>
    tpu.vector_store %arg3[%c0_11, %c0_12], %34 {strides = array<i32>} : memref<8x128xf32, #tpu.memory_space<vmem>>, vector<8x128xf32>,
    return
  }
  func.func @transform_0(%arg0: i32) -> (i32, i32) {
    %c0_i32 = arith.constant 0 : i32
    %c0_i32_0 = arith.constant 0 : i32
    return %arg0, %c0_i32 : i32, i32
  }
  func.func @transform_1(%arg0: i32) -> (i32, i32) {
    %c0_i32 = arith.constant 0 : i32
    %c0_i32_0 = arith.constant 0 : i32
    return %arg0, %c0_i32 : i32, i32
  }
  func.func @transform_2(%arg0: i32) -> (i32, i32) {
    %c0_i32 = arith.constant 0 : i32
    %c0_i32_0 = arith.constant 0 : i32
    return %arg0, %c0_i32 : i32, i32
  }
}

</mosaic_0001>

<llo_original>
// kernel: tpu_custom_call.1
$region0: #{tpu_custom_call.1}
  #allocation0 [shape = 'u32[]', space=smem, size = 0x4, offset = 0x4, fixed_abs, tag = 'smem constant byte address 0x4 - core index']
  #allocation1 [shape = 'u32[144,128]{1,0:T(1,128)}', space=vmem, size = 0x12000, scoped, tag = 'internal scratch']
  %s0 = inlined_call_operand.vmem [shape: f32[8,32], index: 0, kind: input, shape index: {}]
  %s1 = inlined_call_operand.vmem [shape: f32[8,1], index: 1, kind: input, shape index: {}]
  %s2 = inlined_call_operand.hbm [shape: f32[8,128], index: 2, kind: output, shape index: {}]
  %s3 = sld [smem:[#allocation0]]
  $region18: #{tpu_custom_call.1} parent=0
    _
  %s5 = ssub.s32 1, %s3
  %s6 = scalar_select 0, %s5, %s3
  $region1: #{tpu_custom_call.1} parent=0
    #allocation2 [shape = 'u8[4096]{0}', space=vmem, size = 0x1000, scoped, tag = 'output window, operand 0, single buffered']
    #allocation3 [shape = 's32[1]{0}', space=sflag, size = 0x4, scoped, tag = 'scoped memory for tpu_custom_call.1']
    %7 = vsyncpa [#allocation3], 0
    // Predicated region
    $region2: #{tpu_custom_call.1} parent=1 // pred_check
      _
    $region3: #{tpu_custom_call.1} parent=1 // pred_check_branch
      %9 = sbr.rel (0) target = $region5
    $region4: #{tpu_custom_call.1} parent=1 // pred_region
      _
    $region5: #{tpu_custom_call.1} parent=1 // pred_fallthru
      _
    // Predicated region
    $region6: #{tpu_custom_call.1} parent=1 // pred_check
      _
    $region7: #{tpu_custom_call.1} parent=1 // pred_check_branch
      %11 = sbr.rel (0) target = $region9
    $region8: #{tpu_custom_call.1} parent=1 // pred_region
      _
    $region9: #{tpu_custom_call.1} parent=1 // pred_fallthru
      _
    %v12 = vld [vmem:[%s0] sm:$0xff]
    %vm13 = vcmask 261120
    %v14 = vsel %vm13, %v12, -inf
    %15 = vmax.xlane.f32.xlu0 %v14
    %v16 = vpop.xlane.xlu0 %15
    %v17 = vsub.f32 %v12, %v16
    %v18 = vmul.f32 %v17, 1.442695
    %v19 = vpow.pop %v18
    %v20 = vsel %vm13, %v19, 0.0
    %21 = vadd.xlane.f32.xlu0 %v20
    %v22 = vpop.xlane.xlu0 %21
    %v23 = vlog2.pop %v22
    %v24 = vmul.f32 %v23, 0.6931472
    %v25 = vsel %vm13, %v17, 0.0
    %26 = vadd.xlane.f32.xlu0 %v25
    %v27 = vpop.xlane.xlu0 %26
    %v28 = vmul.f32 %v16, 32.0
    %v29 = vadd.f32 %v27, %v28
    %v30 = vld [vmem:[%s1] sm:$0xff]
    %v31 = vmul.f32 %v30, 0.7
    %v32 = vmul.f32 %v29, 0.009375
    %v33 = vadd.f32 %v31, %v32
    %v34 = vadd.f32 %v16, %v24
    %v35 = vsub.f32 %v34, %v33
    %v36 = vlaneseq
    %v37 = vshrl.u32 %v36, 7
    %s38 = smul.u32 0, 8
    %v39 = vstv %s38
    %v40 = vadd.s32 %v37, %v39
    %vm41 = vcmp.lt.s32.totalorder %v40, 8
    %v42 = vsel %vm41, %v35, 0.0
    %vm43 = vcmask 7168
    %v44 = vsel %vm43, %v42, 0.0
    %45 = vadd.xlane.f32.xlu0 %v44
    %v46 = vpop.xlane.xlu0 %45
    %v47 = vrot.slane %v46, 4
    %v48 = vadd.f32 %v46, %v47
    %v49 = vrot.slane %v48, 2
    %v50 = vadd.f32 %v48, %v49
    %v51 = vrot.slane %v50, 1
    %v52 = vadd.f32 %v50, %v51
    %s53 = vtos %v52
    %v54 = vstv %s53
    %55 = vst [vmem:[#allocation2] sm:$0xff] %v54
    // Predicated region
    $region10: #{tpu_custom_call.1} parent=1 // pred_check
      _
    $region11: #{tpu_custom_call.1} parent=1 // pred_check_branch
      %57 = sbr.rel (0) target = $region13
    $region12: #{tpu_custom_call.1} parent=1 // pred_region
      %s59 = ssub.s32 128, 128
      %60 = vsyncadd [#allocation3], %s59
      %s62 = sshll.u32 [#allocation2], 4
      %s63 = int_to_ptr.vmem [resolvable:$true] %s62
      %65 = dma.vmem_to_hbm [thread:$0]  %s63, 128, %s2, [#allocation3]
    $region13: #{tpu_custom_call.1} parent=1 // pred_fallthru
      _
    // Predicated region
    $region14: #{tpu_custom_call.1} parent=1 // pred_check
      _
    $region15: #{tpu_custom_call.1} parent=1 // pred_check_branch
      %67 = sbr.rel (0) target = $region17
    $region16: #{tpu_custom_call.1} parent=1 // pred_region
      %68 = dma.done [#allocation3], 128
    $region17: #{tpu_custom_call.1} parent=1 // pred_fallthru
      _
    %69 = vsyncpa [#allocation3], 1

</llo_original>
